<compile_context>
chip_gen: v6e
topology: v6e:2x2x1
jax: 0.10.0
libtpu: 0.0.40
codegen_flags: <defaults>
</compile_context>

<pallas_src>
import jax
import jax.numpy as jnp
from jax.experimental import pallas as pl
from jax.experimental.pallas import tpu as pltpu


def conv_head_kernel(x_ref, w1_ref, b1_ref, w2_ref, b2_ref, o_ref):
    # x_ref : (TILE_B, C_in,  TILE_N)   channels on sublanes, points on lanes
    # w1_ref: (C_in,  C_in)             PyTorch Conv1d weight layout (out, in)
    # b1_ref: (C_in,  1)                broadcast along lanes, f32
    # w2_ref: (C_out, C_in)
    # b2_ref: (C_out, 1)
    # o_ref : (TILE_B, C_out, TILE_N)
    w1 = w1_ref[...]
    w2 = w2_ref[...]
    b1 = b1_ref[...]
    b2 = b2_ref[...]
    tile_b = x_ref.shape[0]
    for i in range(tile_b):  # static, small (<=8) -> unrolled
        x = x_ref[i]
        h = jnp.dot(w1, x, preferred_element_type=jnp.float32) + b1
        h = jnp.maximum(h, 0.0)          # ReLU on the f32 accumulation (VPU)
        h = h.astype(x.dtype)            # back to streaming dtype for 2nd MXU pass
        o = jnp.dot(w2, h, preferred_element_type=jnp.float32) + b2
        o_ref[i] = o.astype(o_ref.dtype)


def conv_head_forward(x_ncw, w1, b1, w2, b2, *,
                      compute_dtype=jnp.bfloat16,
                      vmem_budget_bytes=24 << 20):
    """ConvHead forward.

    x_ncw: [B, C_in, N] (PyTorch Conv1d layout).  Returns [B, C_out, N] in
    x's original dtype.
    w1: [C_in, C_in], b1: [C_in], w2: [C_out, C_in], b2: [C_out]
    compute_dtype: streaming dtype for x/w1/w2 (default bf16; the kernel is
      HBM-bound at PointNet2 channel widths).  Pass None for exact f32.
      Bias add, ReLU and MXU accumulation are always f32.
    """
    B, C_in, N = x_ncw.shape
    C_out = w2.shape[0]
    out_dtype = x_ncw.dtype

    x_in = x_ncw
    if compute_dtype is not None:
        x_in = x_in.astype(compute_dtype)
        w1 = w1.astype(compute_dtype)
        w2 = w2.astype(compute_dtype)

    in_itemsize = jnp.dtype(x_in.dtype).itemsize
    out_itemsize = jnp.dtype(out_dtype).itemsize

    # Biases stay f32 (added after the f32 MXU accumulation), shaped (C, 1)
    # so they broadcast along the lane (point) axis.
    b1_2d = b1.astype(jnp.float32).reshape(C_in, 1)
    b2_2d = b2.astype(jnp.float32).reshape(C_out, 1)

    # --- Tiling: lane-dense point tiles sized from a VMEM budget -----------
    # Per-point VMEM of a grid step: double-buffered x and out tiles plus the
    # f32 h / accumulator temporaries.
    bytes_per_point = (2 * C_in * in_itemsize
                       + 2 * C_out * out_itemsize
                       + (C_in + C_out) * 4)
    max_points = max(128, vmem_budget_bytes // bytes_per_point)

    n_rounded = pl.cdiv(N, 128) * 128            # keep tile_n a multiple of 128
    tile_n = max(128, min(n_rounded, (max_points // 128) * 128))
    tile_b = 1
    if tile_n >= n_rounded:
        tile_n = n_rounded
        # One tile already spans N: block over batch to amortize the ~0.35us
        # per-grid-step overhead (short unrolled loop in the kernel).
        tile_b = int(max(1, min(B, 8, max_points // tile_n)))

    grid = (pl.cdiv(B, tile_b), pl.cdiv(N, tile_n))

    weight_bytes = (C_in * C_in + C_out * C_in) * in_itemsize + (C_in + C_out) * 4
    vmem_needed = tile_b * tile_n * bytes_per_point + 2 * weight_bytes
    # Explicit scoped-VMEM limit: >= default 32 MiB, capped well below v7x's
    # 64 MiB physical so double-buffering depth is preserved.
    vmem_limit = int(min(max(2 * vmem_needed, 32 << 20), 48 << 20))

    cost = pl.CostEstimate(
        flops=2 * B * N * (C_in * C_in + C_in * C_out),
        transcendentals=0,
        bytes_accessed=B * C_in * N * in_itemsize
        + B * C_out * N * out_itemsize
        + (C_in * C_in + C_out * C_in) * in_itemsize
        + (C_in + C_out) * 4,
    )

    out = pl.pallas_call(
        conv_head_kernel,
        out_shape=jax.ShapeDtypeStruct((B, C_out, N), out_dtype),
        grid_spec=pltpu.PrefetchScalarGridSpec(
            num_scalar_prefetch=0,
            grid=grid,
            in_specs=[
                pl.BlockSpec((tile_b, C_in, tile_n), lambda b, n: (b, 0, n)),
                pl.BlockSpec((C_in, C_in), lambda b, n: (0, 0)),
                pl.BlockSpec((C_in, 1), lambda b, n: (0, 0)),
                pl.BlockSpec((C_out, C_in), lambda b, n: (0, 0)),
                pl.BlockSpec((C_out, 1), lambda b, n: (0, 0)),
            ],
            out_specs=pl.BlockSpec((tile_b, C_out, tile_n), lambda b, n: (b, 0, n)),
        ),
        compiler_params=pltpu.CompilerParams(
            dimension_semantics=("parallel", "parallel"),
            vmem_limit_bytes=vmem_limit,
        ),
        cost_estimate=cost,
    )(x_in, w1, b1_2d, w2, b2_2d)
    return out


def reference_forward(x_ncw, w1, b1, w2, b2):
    """Pure-JAX reference of the PyTorch module (1x1 Conv1d -> ReLU -> 1x1 Conv1d)."""
    h = jnp.einsum("oi,bin->bon", w1, x_ncw) + b1[None, :, None]
    h = jnp.maximum(h, 0.0)
    return jnp.einsum("oi,bin->bon", w2, h) + b2[None, :, None]


if __name__ == "__main__":
    B, C_in, C_out, N = 2, 32, 16, 256

    key = jax.random.PRNGKey(0)
    kx, k1, k2, k3, k4 = jax.random.split(key, 5)

    # Deterministic synthetic parameters (PyTorch-like uniform init scale).
    bound1 = 1.0 / (C_in ** 0.5)
    w1 = jax.random.uniform(k1, (C_in, C_in), jnp.float32, -bound1, bound1)
    b1 = jax.random.uniform(k2, (C_in,), jnp.float32, -bound1, bound1)
    w2 = jax.random.uniform(k3, (C_out, C_in), jnp.float32, -bound1, bound1)
    b2 = jax.random.uniform(k4, (C_out,), jnp.float32, -bound1, bound1)

    x = jax.random.normal(kx, (B, C_in, N), jnp.float32)  # [B, C_in, N]
    ref = reference_forward(x, w1, b1, w2, b2)

    # Exact f32 streaming path.
    out_f32 = jax.block_until_ready(
        conv_head_forward(x, w1, b1, w2, b2, compute_dtype=None))
    assert out_f32.shape == (B, C_out, N)
    assert out_f32.dtype == x.dtype
    assert jnp.allclose(out_f32, ref, atol=1e-4, rtol=1e-4), "f32 mismatch vs reference"

    # Default bf16-streaming path (bias/ReLU/accumulation stay f32).
    out_bf16 = jax.block_until_ready(conv_head_forward(x, w1, b1, w2, b2))
    assert out_bf16.shape == (B, C_out, N)
    assert out_bf16.dtype == x.dtype
    assert jnp.allclose(out_bf16, ref, atol=1e-1, rtol=1e-1), "bf16 mismatch vs reference"

    # Ragged point count (N not a multiple of 128): no host-side pad/slice,
    # the boundary tile's stores are masked by Pallas.
    N2 = 200
    x2 = jax.random.normal(kx, (B, C_in, N2), jnp.float32)
    ref2 = reference_forward(x2, w1, b1, w2, b2)
    out2 = jax.block_until_ready(
        conv_head_forward(x2, w1, b1, w2, b2, compute_dtype=None))
    assert out2.shape == (B, C_out, N2)
    assert jnp.allclose(out2, ref2, atol=1e-4, rtol=1e-4), "ragged-N mismatch vs reference"

    # TODO(synk): norm_fn (e.g. BatchNorm1d) is None in this config; not implemented.
    print("KERNEL_OK")
</pallas_src>

<mosaic_0001>
module attributes {stable_mosaic.version = 11 : i64} {
  func.func @conv_head_kernel(%arg0: i32, %arg1: i32, %arg2: memref<2x32x256xf32, #tpu.memory_space<vmem>>, %arg3: memref<32x32xf32, #tpu.memory_space<vmem>>, %arg4: memref<32x1xf32, #tpu.memory_space<vmem>>, %arg5: memref<16x32xf32, #tpu.memory_space<vmem>>, %arg6: memref<16x1xf32, #tpu.memory_space<vmem>>, %arg7: memref<2x16x256xf32, #tpu.memory_space<vmem>>) attributes {dimension_semantics = [#tpu.dimension_semantics<parallel>, #tpu.dimension_semantics<parallel>], iteration_bounds = array<i64: 1, 1>, scalar_prefetch = 0 : i64, scratch_operands = 0 : i64, tpu.core_type = #tpu.core_type<tc>, window_params = [{transform_indices = @transform_0, window_bounds = array<i64: 2, 32, 256>}, {pipeline_mode = #tpu.pipeline_mode<synchronous>, transform_indices = @transform_1, window_bounds = array<i64: 32, 32>}, {pipeline_mode = #tpu.pipeline_mode<synchronous>, transform_indices = @transform_2, window_bounds = array<i64: 32, 1>}, {pipeline_mode = #tpu.pipeline_mode<synchronous>, transform_indices = @transform_3, window_bounds = array<i64: 16, 32>}, {pipeline_mode = #tpu.pipeline_mode<synchronous>, transform_indices = @transform_4, window_bounds = array<i64: 16, 1>}, {transform_indices = @transform_5, window_bounds = array<i64: 2, 16, 256>}]} {
    %c0 = arith.constant 0 : index
    %c0_0 = arith.constant 0 : index
    %0 = vector.load %arg3[%c0, %c0_0] : memref<32x32xf32, #tpu.memory_space<vmem>>, vector<32x32xf32>
    %c0_1 = arith.constant 0 : index
    %c0_2 = arith.constant 0 : index
    %1 = vector.load %arg5[%c0_1, %c0_2] : memref<16x32xf32, #tpu.memory_space<vmem>>, vector<16x32xf32>
    %c0_3 = arith.constant 0 : index
    %c0_4 = arith.constant 0 : index
    %2 = vector.load %arg4[%c0_3, %c0_4] : memref<32x1xf32, #tpu.memory_space<vmem>>, vector<32x1xf32>
    %c0_5 = arith.constant 0 : index
    %c0_6 = arith.constant 0 : index
    %3 = vector.load %arg6[%c0_5, %c0_6] : memref<16x1xf32, #tpu.memory_space<vmem>>, vector<16x1xf32>
    %c0_7 = arith.constant 0 : index
    %c0_8 = arith.constant 0 : index
    %c0_9 = arith.constant 0 : index
    %4 = vector.load %arg2[%c0_7, %c0_8, %c0_9] : memref<2x32x256xf32, #tpu.memory_space<vmem>>, vector<1x32x256xf32>
    %5 = vector.shape_cast %4 : vector<1x32x256xf32> to vector<32x256xf32>
    %cst = arith.constant dense<0.000000e+00> : vector<32x256xf32>
    %6 = tpu.matmul %0, %5, %cst {dimension_numbers = #tpu.dot_dimension_numbers<[1], [0], [0], [1], [0, 0, 1, 1], [], []>} : vector<32x32xf32>, vector<32x256xf32>, vector<32x256xf32> -> vector<32x256xf32>
    %7 = vector.broadcast %2 : vector<32x1xf32> to vector<32x256xf32>
    %8 = arith.addf %6, %7 : vector<32x256xf32>
    %cst_10 = arith.constant 0.000000e+00 : f32
    %9 = vector.broadcast %cst_10 : f32 to vector<32x256xf32>
    %10 = arith.maximumf %8, %9 : vector<32x256xf32>
    %cst_11 = arith.constant dense<0.000000e+00> : vector<16x256xf32>
    %11 = tpu.matmul %1, %10, %cst_11 {dimension_numbers = #tpu.dot_dimension_numbers<[1], [0], [0], [1], [0, 0, 1, 1], [], []>} : vector<16x32xf32>, vector<32x256xf32>, vector<16x256xf32> -> vector<16x256xf32>
    %12 = vector.broadcast %3 : vector<16x1xf32> to vector<16x256xf32>
    %13 = arith.addf %11, %12 : vector<16x256xf32>
    %c0_12 = arith.constant 0 : index
    %c0_13 = arith.constant 0 : index
    %c0_14 = arith.constant 0 : index
    %14 = vector.load %arg7[%c0_12, %c0_13, %c0_14] : memref<2x16x256xf32, #tpu.memory_space<vmem>>, vector<1x16x256xf32>
    %15 = vector.shape_cast %14 : vector<1x16x256xf32> to vector<16x256xf32>
    %16 = vector.shape_cast %13 : vector<16x256xf32> to vector<1x16x256xf32>
    tpu.vector_store %arg7[%c0_12, %c0_13, %c0_14], %16 {strides = array<i32>} : memref<2x16x256xf32, #tpu.memory_space<vmem>>, vector<1x16x256xf32>,
    %c1 = arith.constant 1 : index
    %c0_15 = arith.constant 0 : index
    %c0_16 = arith.constant 0 : index
    %17 = vector.load %arg2[%c1, %c0_15, %c0_16] : memref<2x32x256xf32, #tpu.memory_space<vmem>>, vector<1x32x256xf32>
    %18 = vector.shape_cast %17 : vector<1x32x256xf32> to vector<32x256xf32>
    %cst_17 = arith.constant dense<0.000000e+00> : vector<32x256xf32>
    %19 = tpu.matmul %0, %18, %cst_17 {dimension_numbers = #tpu.dot_dimension_numbers<[1], [0], [0], [1], [0, 0, 1, 1], [], []>} : vector<32x32xf32>, vector<32x256xf32>, vector<32x256xf32> -> vector<32x256xf32>
    %20 = vector.broadcast %2 : vector<32x1xf32> to vector<32x256xf32>
    %21 = arith.addf %19, %20 : vector<32x256xf32>
    %cst_18 = arith.constant 0.000000e+00 : f32
    %22 = vector.broadcast %cst_18 : f32 to vector<32x256xf32>
    %23 = arith.maximumf %21, %22 : vector<32x256xf32>
    %cst_19 = arith.constant dense<0.000000e+00> : vector<16x256xf32>
    %24 = tpu.matmul %1, %23, %cst_19 {dimension_numbers = #tpu.dot_dimension_numbers<[1], [0], [0], [1], [0, 0, 1, 1], [], []>} : vector<16x32xf32>, vector<32x256xf32>, vector<16x256xf32> -> vector<16x256xf32>
    %25 = vector.broadcast %3 : vector<16x1xf32> to vector<16x256xf32>
    %26 = arith.addf %24, %25 : vector<16x256xf32>
    %c1_20 = arith.constant 1 : index
    %c0_21 = arith.constant 0 : index
    %c0_22 = arith.constant 0 : index
    %27 = vector.load %arg7[%c1_20, %c0_21, %c0_22] : memref<2x16x256xf32, #tpu.memory_space<vmem>>, vector<1x16x256xf32>
    %28 = vector.shape_cast %27 : vector<1x16x256xf32> to vector<16x256xf32>
    %29 = vector.shape_cast %26 : vector<16x256xf32> to vector<1x16x256xf32>
    tpu.vector_store %arg7[%c1_20, %c0_21, %c0_22], %29 {strides = array<i32>} : memref<2x16x256xf32, #tpu.memory_space<vmem>>, vector<1x16x256xf32>,
    return
  }
  func.func @transform_0(%arg0: i32, %arg1: i32) -> (i32, i32, i32) {
    %c0_i32 = arith.constant 0 : i32
    %c0_i32_0 = arith.constant 0 : i32
    return %arg0, %c0_i32, %arg1 : i32, i32, i32
  }
  func.func @transform_1(%arg0: i32, %arg1: i32) -> (i32, i32) {
    %c0_i32 = arith.constant 0 : i32
    %c0_i32_0 = arith.constant 0 : i32
    %c0_i32_1 = arith.constant 0 : i32
    return %c0_i32, %c0_i32_0 : i32, i32
  }
  func.func @transform_2(%arg0: i32, %arg1: i32) -> (i32, i32) {
    %c0_i32 = arith.constant 0 : i32
    %c0_i32_0 = arith.constant 0 : i32
    %c0_i32_1 = arith.constant 0 : i32
    return %c0_i32, %c0_i32_0 : i32, i32
  }
  func.func @transform_3(%arg0: i32, %arg1: i32) -> (i32, i32) {
    %c0_i32 = arith.constant 0 : i32
    %c0_i32_0 = arith.constant 0 : i32
    %c0_i32_1 = arith.constant 0 : i32
    return %c0_i32, %c0_i32_0 : i32, i32
  }
  func.func @transform_4(%arg0: i32, %arg1: i32) -> (i32, i32) {
    %c0_i32 = arith.constant 0 : i32
    %c0_i32_0 = arith.constant 0 : i32
    %c0_i32_1 = arith.constant 0 : i32
    return %c0_i32, %c0_i32_0 : i32, i32
  }
  func.func @transform_5(%arg0: i32, %arg1: i32) -> (i32, i32, i32) {
    %c0_i32 = arith.constant 0 : i32
    %c0_i32_0 = arith.constant 0 : i32
    return %arg0, %c0_i32, %arg1 : i32, i32, i32
  }
}

</mosaic_0001>

<llo_original>
// kernel: tpu_custom_call.1
$region0: #{tpu_custom_call.1}
  #allocation0 [shape = 'u32[]', space=smem, size = 0x4, offset = 0x4, fixed_abs, tag = 'smem constant byte address 0x4 - core index']
  #allocation1 [shape = 'u32[144,128]{1,0:T(1,128)}', space=vmem, size = 0x12000, scoped, tag = 'internal scratch']
  %s0 = inlined_call_operand.hbm [shape: f32[2,32,256], index: 0, kind: input, shape index: {}]
  %s1 = inlined_call_operand.vmem [shape: f32[32,32], index: 1, kind: input, shape index: {}]
  %s2 = inlined_call_operand.vmem [shape: f32[32,1], index: 2, kind: input, shape index: {}]
  %s3 = inlined_call_operand.vmem [shape: f32[16,32], index: 3, kind: input, shape index: {}]
  %s4 = inlined_call_operand.vmem [shape: f32[16,1], index: 4, kind: input, shape index: {}]
  %s5 = inlined_call_operand.hbm [shape: f32[2,16,256], index: 5, kind: output, shape index: {}]
  %s6 = sld [smem:[#allocation0]]
  $region34: #{tpu_custom_call.1} parent=0
    _
  %s8 = ssub.s32 1, %s6
  %s9 = scalar_select 0, %s8, %s6
  $region1: #{tpu_custom_call.1} parent=0
    #allocation2 [shape = 'u8[65536]{0}', space=vmem, size = 0x10000, scoped, tag = 'input window, operand 0, single buffered']
    #allocation3 [shape = 's32[1]{0}', space=sflag, size = 0x4, scoped, tag = 'scoped memory for tpu_custom_call.1']
    #allocation4 [shape = 's32[1]{0}', space=sflag, size = 0x4, scoped, tag = 'scoped memory for tpu_custom_call.1']
    #allocation5 [shape = 'u8[32768]{0}', space=vmem, size = 0x8000, scoped, tag = 'output window, operand 0, single buffered']
    %10 = vsyncpa [#allocation3], 0
    %11 = vsyncpa [#allocation4], 0
    // Predicated region
    $region2: #{tpu_custom_call.1} parent=1 // pred_check
      _
    $region3: #{tpu_custom_call.1} parent=1 // pred_check_branch
      %13 = sbr.rel (0) target = $region5
    $region4: #{tpu_custom_call.1} parent=1 // pred_region
      %s15 = ssub.s32 2048, 2048
      %16 = vsyncadd [#allocation3], %s15
      %s17 = sshll.u32 [#allocation2], 4
      %s18 = int_to_ptr.vmem [resolvable:$true] %s17
      %23 = dma.hbm_to_vmem [thread:$0]  %s0, 2048, %s18, [#allocation3], 256, 256, 16
    $region5: #{tpu_custom_call.1} parent=1 // pred_fallthru
      _
    // Predicated region
    $region6: #{tpu_custom_call.1} parent=1 // pred_check
      _
    $region7: #{tpu_custom_call.1} parent=1 // pred_check_branch
      %25 = sbr.rel (0) target = $region9
    $region8: #{tpu_custom_call.1} parent=1 // pred_region
      _
    $region9: #{tpu_custom_call.1} parent=1 // pred_fallthru
      _
    // Predicated region
    $region10: #{tpu_custom_call.1} parent=1 // pred_check
      _
    $region11: #{tpu_custom_call.1} parent=1 // pred_check_branch
      %27 = sbr.rel (0) target = $region13
    $region12: #{tpu_custom_call.1} parent=1 // pred_region
      _
    $region13: #{tpu_custom_call.1} parent=1 // pred_fallthru
      _
    // Predicated region
    $region14: #{tpu_custom_call.1} parent=1 // pred_check
      _
    $region15: #{tpu_custom_call.1} parent=1 // pred_check_branch
      %29 = sbr.rel (0) target = $region17
    $region16: #{tpu_custom_call.1} parent=1 // pred_region
      _
    $region17: #{tpu_custom_call.1} parent=1 // pred_fallthru
      _
    // Predicated region
    $region18: #{tpu_custom_call.1} parent=1 // pred_check
      _
    $region19: #{tpu_custom_call.1} parent=1 // pred_check_branch
      %31 = sbr.rel (0) target = $region21
    $region20: #{tpu_custom_call.1} parent=1 // pred_region
      _
    $region21: #{tpu_custom_call.1} parent=1 // pred_fallthru
      _
    // Predicated region
    $region22: #{tpu_custom_call.1} parent=1 // pred_check
      _
    $region23: #{tpu_custom_call.1} parent=1 // pred_check_branch
      %33 = sbr.rel (0) target = $region25
    $region24: #{tpu_custom_call.1} parent=1 // pred_region
      %34 = dma.done [#allocation3], 2048
    $region25: #{tpu_custom_call.1} parent=1 // pred_fallthru
      _
    %v35 = vld [vmem:[%s1] sm:$0xff]
    %v36 = vld [vmem:[%s1 + $0x8] sm:$0xff]
    %v37 = vld [vmem:[%s1 + $0x10] sm:$0xff]
    %v38 = vld [vmem:[%s1 + $0x18] sm:$0xff]
    %v39 = vld [vmem:[%s3] sm:$0xff]
    %v40 = vld [vmem:[%s3 + $0x8] sm:$0xff]
    %v41 = vld [vmem:[%s2] sm:$0xff]
    %v42 = vld [vmem:[%s2 + $0x8] sm:$0xff]
    %v43 = vld [vmem:[%s2 + $0x10] sm:$0xff]
    %v44 = vld [vmem:[%s2 + $0x18] sm:$0xff]
    %v45 = vld [vmem:[%s4] sm:$0xff]
    %v46 = vld [vmem:[%s4 + $0x8] sm:$0xff]
    %v47 = vld [vmem:[#allocation2] sm:$0xff]
    %v48 = vld [vmem:[#allocation2 + $0x8] sm:$0xff]
    %v49 = vld [vmem:[#allocation2 + $0x10] sm:$0xff]
    %v50 = vld [vmem:[#allocation2 + $0x18] sm:$0xff]
    %v51 = vld [vmem:[#allocation2 + $0x20] sm:$0xff]
    %v52 = vld [vmem:[#allocation2 + $0x28] sm:$0xff]
    %v53 = vld [vmem:[#allocation2 + $0x30] sm:$0xff]
    %v54 = vld [vmem:[#allocation2 + $0x38] sm:$0xff]
    %56 = vset.pattern.permute.xlu0 0
    %57 = vperm.xlu0 %56, %v41
    %v58 = vpop.permute.xlu0 %57
    %61 = vset.pattern.permute.xlu0 0
    %62 = vperm.xlu0 %61, %v42
    %v63 = vpop.permute.xlu0 %62
    %66 = vset.pattern.permute.xlu0 0
    %67 = vperm.xlu0 %66, %v43
    %v68 = vpop.permute.xlu0 %67
    %71 = vset.pattern.permute.xlu0 0
    %72 = vperm.xlu0 %71, %v44
    %v73 = vpop.permute.xlu0 %72
    %vm75 = vcmask 261120
    %v77 = vsel %vm75, %v35, 0
    %v80 = vsel %vm75, %v36, 0
    %v83 = vsel %vm75, %v37, 0
    %v86 = vsel %vm75, %v38, 0
    %88 = vmatprep.subr.mxu0 0.0
    %89 = vmatpush1.msra.mxu0 0.0
    %90 = vmatprep.subr.mxu0 0.0
    %91 = vmatpush1.msra.mxu0 0.0
    %92 = vmatprep.subr.mxu0 0.0
    %93 = vmatpush1.msra.mxu0 0.0
    %94 = vmatprep.subr.mxu0 0.0
    %95 = vmatpush1.msra.mxu0 0.0
    %96 = vmatprep.subr.mxu0 0.0
    %97 = vmatpush1.msra.mxu0 0.0
    %98 = vmatprep.subr.mxu0 0.0
    %99 = vmatpush1.msra.mxu0 0.0
    %100 = vmatprep.subr.mxu0 0.0
    %101 = vmatpush1.msra.mxu0 0.0
    %102 = vmatprep.subr.mxu0 0.0
    %103 = vmatpush1.msra.mxu0 0.0
    %104 = vmatprep.subr.mxu0 0.0
    %105 = vmatpush1.msra.mxu0 0.0
    %106 = vmatprep.subr.mxu0 0.0
    %107 = vmatpush1.msra.mxu0 0.0
    %108 = vmatprep.subr.mxu0 0.0
    %109 = vmatpush1.msra.mxu0 0.0
    %110 = vmatprep.subr.mxu0 0.0
    %111 = vmatpush1.msra.mxu0 0.0
    %112 = vmatprep.subr.mxu0 %v54
    %113 = vmatpush1.msra.mxu0 %v53
    %114 = vmatprep.subr.mxu0 %v52
    %115 = vmatpush1.msra.mxu0 %v51
    %116 = vmatprep.subr.mxu0 %v50
    %117 = vmatpush1.msra.mxu0 %v49
    %118 = vmatprep.subr.mxu0 %v48
    %119 = vmatpush1.msra.mxu0 %v47
    %120 = vmatprep.subr.mxu0 0.0
    %121 = vmatpush2.msra.mxu0 0.0
    %122 = vmatprep.subr.mxu0 0.0
    %123 = vmatpush2.msra.mxu0 0.0
    %124 = vmatprep.subr.mxu0 0.0
    %125 = vmatpush2.msra.mxu0 0.0
    %126 = vmatprep.subr.mxu0 0.0
    %127 = vmatpush2.msra.mxu0 0.0
    %128 = vmatprep.subr.mxu0 0.0
    %129 = vmatpush2.msra.mxu0 0.0
    %130 = vmatprep.subr.mxu0 0.0
    %131 = vmatpush2.msra.mxu0 0.0
    %132 = vmatprep.subr.mxu0 0.0
    %133 = vmatpush2.msra.mxu0 0.0
    %134 = vmatprep.subr.mxu0 0.0
    %135 = vmatpush2.msra.mxu0 0.0
    %136 = vmatprep.subr.mxu0 0.0
    %137 = vmatpush2.msra.mxu0 0.0
    %138 = vmatprep.subr.mxu0 0.0
    %139 = vmatpush2.msra.mxu0 0.0
    %140 = vmatprep.subr.mxu0 0.0
    %141 = vmatpush2.msra.mxu0 0.0
    %142 = vmatprep.subr.mxu0 0.0
    %143 = vmatpush2.msra.mxu0 0.0
    %144 = vmatprep.subr.mxu0 0.0
    %145 = vmatpush2.msra.mxu0 0.0
    %146 = vmatprep.subr.mxu0 0.0
    %147 = vmatpush2.msra.mxu0 0.0
    %148 = vmatprep.subr.mxu0 0.0
    %149 = vmatpush2.msra.mxu0 0.0
    %150 = vmatprep.subr.mxu0 0.0
    %151 = vmatpush2.msra.mxu0 0.0
    %152 = vmatprep.mubr.f32.mxu0 0.0
    %153 = vmatmul.mubr.f32.gmra.mxu0 %v77
    %v154 = vpop.f32.mrf.mxu0
    %v155 = vadd.f32 %v58, %v154
    %v156 = vpop.f32.mrf.mxu0
    %v157 = vadd.f32 %v58, %v156
    %158 = vmatprep.mubr.f32.mxu0 0.0
    %159 = vmatmul.mubr.f32.gmra.mxu0 %v80
    %v160 = vpop.f32.mrf.mxu0
    %v161 = vadd.f32 %v63, %v160
    %v162 = vpop.f32.mrf.mxu0
    %v163 = vadd.f32 %v63, %v162
    %164 = vmatprep.mubr.f32.mxu0 0.0
    %165 = vmatmul.mubr.f32.gmra.mxu0 %v83
    %v166 = vpop.f32.mrf.mxu0
    %v167 = vadd.f32 %v68, %v166
    %v168 = vpop.f32.mrf.mxu0
    %v169 = vadd.f32 %v68, %v168
    %170 = vmatprep.mubr.f32.mxu0 0.0
    %171 = vmatmul.mubr.f32.gmra.mxu0 %v86
    %v172 = vpop.f32.mrf.mxu0
    %v173 = vadd.f32 %v73, %v172
    %v174 = vpop.f32.mrf.mxu0
    %v175 = vadd.f32 %v73, %v174
    %176 = vdwg.mxu0
    %v177 = vmax.f32 %v155, 0.0
    %v178 = vmax.f32 %v157, 0.0
    %v179 = vmax.f32 %v161, 0.0
    %v180 = vmax.f32 %v163, 0.0
    %v181 = vmax.f32 %v167, 0.0
    %v182 = vmax.f32 %v169, 0.0
    %v183 = vmax.f32 %v173, 0.0
    %v184 = vmax.f32 %v175, 0.0
    %186 = vset.pattern.permute.xlu0 0
    %187 = vperm.xlu0 %186, %v45
    %v188 = vpop.permute.xlu0 %187
    %191 = vset.pattern.permute.xlu0 0
    %192 = vperm.xlu0 %191, %v46
    %v193 = vpop.permute.xlu0 %192
    %v196 = vsel %vm75, %v39, 0
    %v199 = vsel %vm75, %v40, 0
    %201 = vmatprep.subr.mxu0 0.0
    %202 = vmatpush1.msra.mxu0 0.0
    %203 = vmatprep.subr.mxu0 0.0
    %204 = vmatpush1.msra.mxu0 0.0
    %205 = vmatprep.subr.mxu0 0.0
    %206 = vmatpush1.msra.mxu0 0.0
    %207 = vmatprep.subr.mxu0 0.0
    %208 = vmatpush1.msra.mxu0 0.0
    %209 = vmatprep.subr.mxu0 0.0
    %210 = vmatpush1.msra.mxu0 0.0
    %211 = vmatprep.subr.mxu0 0.0
    %212 = vmatpush1.msra.mxu0 0.0
    %213 = vmatprep.subr.mxu0 0.0
    %214 = vmatpush1.msra.mxu0 0.0
    %215 = vmatprep.subr.mxu0 0.0
    %216 = vmatpush1.msra.mxu0 0.0
    %217 = vmatprep.subr.mxu0 0.0
    %218 = vmatpush1.msra.mxu0 0.0
    %219 = vmatprep.subr.mxu0 0.0
    %220 = vmatpush1.msra.mxu0 0.0
    %221 = vmatprep.subr.mxu0 0.0
    %222 = vmatpush1.msra.mxu0 0.0
    %223 = vmatprep.subr.mxu0 0.0
    %224 = vmatpush1.msra.mxu0 0.0
    %225 = vmatprep.subr.mxu0 %v184
    %226 = vmatpush1.msra.mxu0 %v183
    %227 = vmatprep.subr.mxu0 %v182
    %228 = vmatpush1.msra.mxu0 %v181
    %229 = vmatprep.subr.mxu0 %v180
    %230 = vmatpush1.msra.mxu0 %v179
    %231 = vmatprep.subr.mxu0 %v178
    %232 = vmatpush1.msra.mxu0 %v177
    %233 = vmatprep.subr.mxu0 0.0
    %234 = vmatpush2.msra.mxu0 0.0
    %235 = vmatprep.subr.mxu0 0.0
    %236 = vmatpush2.msra.mxu0 0.0
    %237 = vmatprep.subr.mxu0 0.0
    %238 = vmatpush2.msra.mxu0 0.0
    %239 = vmatprep.subr.mxu0 0.0
    %240 = vmatpush2.msra.mxu0 0.0
    %241 = vmatprep.subr.mxu0 0.0
    %242 = vmatpush2.msra.mxu0 0.0
    %243 = vmatprep.subr.mxu0 0.0
    %244 = vmatpush2.msra.mxu0 0.0
    %245 = vmatprep.subr.mxu0 0.0
    %246 = vmatpush2.msra.mxu0 0.0
    %247 = vmatprep.subr.mxu0 0.0
    %248 = vmatpush2.msra.mxu0 0.0
    %249 = vmatprep.subr.mxu0 0.0
    %250 = vmatpush2.msra.mxu0 0.0
    %251 = vmatprep.subr.mxu0 0.0
    %252 = vmatpush2.msra.mxu0 0.0
    %253 = vmatprep.subr.mxu0 0.0
    %254 = vmatpush2.msra.mxu0 0.0
    %255 = vmatprep.subr.mxu0 0.0
    %256 = vmatpush2.msra.mxu0 0.0
    %257 = vmatprep.subr.mxu0 0.0
    %258 = vmatpush2.msra.mxu0 0.0
    %259 = vmatprep.subr.mxu0 0.0
    %260 = vmatpush2.msra.mxu0 0.0
    %261 = vmatprep.subr.mxu0 0.0
    %262 = vmatpush2.msra.mxu0 0.0
    %263 = vmatprep.subr.mxu0 0.0
    %264 = vmatpush2.msra.mxu0 0.0
    %265 = vmatprep.mubr.f32.mxu0 0.0
    %266 = vmatmul.mubr.f32.gmra.mxu0 %v196
    %v267 = vpop.f32.mrf.mxu0
    %v268 = vadd.f32 %v188, %v267
    %v269 = vpop.f32.mrf.mxu0
    %v270 = vadd.f32 %v188, %v269
    %271 = vmatprep.mubr.f32.mxu0 0.0
    %272 = vmatmul.mubr.f32.gmra.mxu0 %v199
    %v273 = vpop.f32.mrf.mxu0
    %v274 = vadd.f32 %v193, %v273
    %v275 = vpop.f32.mrf.mxu0
    %v276 = vadd.f32 %v193, %v275
    %277 = vdwg.mxu0
    %278 = vst [vmem:[#allocation5] sm:$0xff] %v268
    %279 = vst [vmem:[#allocation5 + $0x8] sm:$0xff] %v270
    %280 = vst [vmem:[#allocation5 + $0x10] sm:$0xff] %v274
    %281 = vst [vmem:[#allocation5 + $0x18] sm:$0xff] %v276
    %s282 = scalar_lea.vmem [#allocation2], 64
    %v283 = vld [vmem:[%s282] sm:$0xff]
    %v284 = vld [vmem:[%s282 + $0x8] sm:$0xff]
    %v285 = vld [vmem:[%s282 + $0x10] sm:$0xff]
    %v286 = vld [vmem:[%s282 + $0x18] sm:$0xff]
    %v287 = vld [vmem:[%s282 + $0x20] sm:$0xff]
    %v288 = vld [vmem:[%s282 + $0x28] sm:$0xff]
    %v289 = vld [vmem:[%s282 + $0x30] sm:$0xff]
    %v290 = vld [vmem:[%s282 + $0x38] sm:$0xff]
    %291 = vmatprep.subr.mxu0 0.0
    %292 = vmatpush1.msra.mxu0 0.0
    %293 = vmatprep.subr.mxu0 0.0
    %294 = vmatpush1.msra.mxu0 0.0
    %295 = vmatprep.subr.mxu0 0.0
    %296 = vmatpush1.msra.mxu0 0.0
    %297 = vmatprep.subr.mxu0 0.0
    %298 = vmatpush1.msra.mxu0 0.0
    %299 = vmatprep.subr.mxu0 0.0
    %300 = vmatpush1.msra.mxu0 0.0
    %301 = vmatprep.subr.mxu0 0.0
    %302 = vmatpush1.msra.mxu0 0.0
    %303 = vmatprep.subr.mxu0 0.0
    %304 = vmatpush1.msra.mxu0 0.0
    %305 = vmatprep.subr.mxu0 0.0
    %306 = vmatpush1.msra.mxu0 0.0
    %307 = vmatprep.subr.mxu0 0.0
    %308 = vmatpush1.msra.mxu0 0.0
    %309 = vmatprep.subr.mxu0 0.0
    %310 = vmatpush1.msra.mxu0 0.0
    %311 = vmatprep.subr.mxu0 0.0
    %312 = vmatpush1.msra.mxu0 0.0
    %313 = vmatprep.subr.mxu0 0.0
    %314 = vmatpush1.msra.mxu0 0.0
    %315 = vmatprep.subr.mxu0 %v290
    %316 = vmatpush1.msra.mxu0 %v289
    %317 = vmatprep.subr.mxu0 %v288
    %318 = vmatpush1.msra.mxu0 %v287
    %319 = vmatprep.subr.mxu0 %v286
    %320 = vmatpush1.msra.mxu0 %v285
    %321 = vmatprep.subr.mxu0 %v284
    %322 = vmatpush1.msra.mxu0 %v283
    %323 = vmatprep.subr.mxu0 0.0
    %324 = vmatpush2.msra.mxu0 0.0
    %325 = vmatprep.subr.mxu0 0.0
    %326 = vmatpush2.msra.mxu0 0.0
    %327 = vmatprep.subr.mxu0 0.0
    %328 = vmatpush2.msra.mxu0 0.0
    %329 = vmatprep.subr.mxu0 0.0
    %330 = vmatpush2.msra.mxu0 0.0
    %331 = vmatprep.subr.mxu0 0.0
    %332 = vmatpush2.msra.mxu0 0.0
    %333 = vmatprep.subr.mxu0 0.0
    %334 = vmatpush2.msra.mxu0 0.0
    %335 = vmatprep.subr.mxu0 0.0
    %336 = vmatpush2.msra.mxu0 0.0
    %337 = vmatprep.subr.mxu0 0.0
    %338 = vmatpush2.msra.mxu0 0.0
    %339 = vmatprep.subr.mxu0 0.0
    %340 = vmatpush2.msra.mxu0 0.0
    %341 = vmatprep.subr.mxu0 0.0
    %342 = vmatpush2.msra.mxu0 0.0
    %343 = vmatprep.subr.mxu0 0.0
    %344 = vmatpush2.msra.mxu0 0.0
    %345 = vmatprep.subr.mxu0 0.0
    %346 = vmatpush2.msra.mxu0 0.0
    %347 = vmatprep.subr.mxu0 0.0
    %348 = vmatpush2.msra.mxu0 0.0
    %349 = vmatprep.subr.mxu0 0.0
    %350 = vmatpush2.msra.mxu0 0.0
    %351 = vmatprep.subr.mxu0 0.0
    %352 = vmatpush2.msra.mxu0 0.0
    %353 = vmatprep.subr.mxu0 0.0
    %354 = vmatpush2.msra.mxu0 0.0
    %355 = vmatprep.mubr.f32.mxu0 0.0
    %356 = vmatmul.mubr.f32.gmra.mxu0 %v77
    %v357 = vpop.f32.mrf.mxu0
    %v358 = vadd.f32 %v58, %v357
    %v359 = vpop.f32.mrf.mxu0
    %v360 = vadd.f32 %v58, %v359
    %361 = vmatprep.mubr.f32.mxu0 0.0
    %362 = vmatmul.mubr.f32.gmra.mxu0 %v80
    %v363 = vpop.f32.mrf.mxu0
    %v364 = vadd.f32 %v63, %v363
    %v365 = vpop.f32.mrf.mxu0
    %v366 = vadd.f32 %v63, %v365
    %367 = vmatprep.mubr.f32.mxu0 0.0
    %368 = vmatmul.mubr.f32.gmra.mxu0 %v83
    %v369 = vpop.f32.mrf.mxu0
    %v370 = vadd.f32 %v68, %v369
    %v371 = vpop.f32.mrf.mxu0
    %v372 = vadd.f32 %v68, %v371
    %373 = vmatprep.mubr.f32.mxu0 0.0
    %374 = vmatmul.mubr.f32.gmra.mxu0 %v86
    %v375 = vpop.f32.mrf.mxu0
    %v376 = vadd.f32 %v73, %v375
    %v377 = vpop.f32.mrf.mxu0
    %v378 = vadd.f32 %v73, %v377
    %379 = vdwg.mxu0
    %v380 = vmax.f32 %v358, 0.0
    %v381 = vmax.f32 %v360, 0.0
    %v382 = vmax.f32 %v364, 0.0
    %v383 = vmax.f32 %v366, 0.0
    %v384 = vmax.f32 %v370, 0.0
    %v385 = vmax.f32 %v372, 0.0
    %v386 = vmax.f32 %v376, 0.0
    %v387 = vmax.f32 %v378, 0.0
    %388 = vmatprep.subr.mxu0 0.0
    %389 = vmatpush1.msra.mxu0 0.0
    %390 = vmatprep.subr.mxu0 0.0
    %391 = vmatpush1.msra.mxu0 0.0
    %392 = vmatprep.subr.mxu0 0.0
    %393 = vmatpush1.msra.mxu0 0.0
    %394 = vmatprep.subr.mxu0 0.0
    %395 = vmatpush1.msra.mxu0 0.0
    %396 = vmatprep.subr.mxu0 0.0
    %397 = vmatpush1.msra.mxu0 0.0
    %398 = vmatprep.subr.mxu0 0.0
    %399 = vmatpush1.msra.mxu0 0.0
    %400 = vmatprep.subr.mxu0 0.0
    %401 = vmatpush1.msra.mxu0 0.0
    %402 = vmatprep.subr.mxu0 0.0
    %403 = vmatpush1.msra.mxu0 0.0
    %404 = vmatprep.subr.mxu0 0.0
    %405 = vmatpush1.msra.mxu0 0.0
    %406 = vmatprep.subr.mxu0 0.0
    %407 = vmatpush1.msra.mxu0 0.0
    %408 = vmatprep.subr.mxu0 0.0
    %409 = vmatpush1.msra.mxu0 0.0
    %410 = vmatprep.subr.mxu0 0.0
    %411 = vmatpush1.msra.mxu0 0.0
    %412 = vmatprep.subr.mxu0 %v387
    %413 = vmatpush1.msra.mxu0 %v386
    %414 = vmatprep.subr.mxu0 %v385
    %415 = vmatpush1.msra.mxu0 %v384
    %416 = vmatprep.subr.mxu0 %v383
    %417 = vmatpush1.msra.mxu0 %v382
    %418 = vmatprep.subr.mxu0 %v381
    %419 = vmatpush1.msra.mxu0 %v380
    %420 = vmatprep.subr.mxu0 0.0
    %421 = vmatpush2.msra.mxu0 0.0
    %422 = vmatprep.subr.mxu0 0.0
    %423 = vmatpush2.msra.mxu0 0.0
    %424 = vmatprep.subr.mxu0 0.0
    %425 = vmatpush2.msra.mxu0 0.0
    %426 = vmatprep.subr.mxu0 0.0
    %427 = vmatpush2.msra.mxu0 0.0
    %428 = vmatprep.subr.mxu0 0.0
    %429 = vmatpush2.msra.mxu0 0.0
    %430 = vmatprep.subr.mxu0 0.0
    %431 = vmatpush2.msra.mxu0 0.0
    %432 = vmatprep.subr.mxu0 0.0
    %433 = vmatpush2.msra.mxu0 0.0
    %434 = vmatprep.subr.mxu0 0.0
    %435 = vmatpush2.msra.mxu0 0.0
    %436 = vmatprep.subr.mxu0 0.0
    %437 = vmatpush2.msra.mxu0 0.0
    %438 = vmatprep.subr.mxu0 0.0
    %439 = vmatpush2.msra.mxu0 0.0
    %440 = vmatprep.subr.mxu0 0.0
    %441 = vmatpush2.msra.mxu0 0.0
    %442 = vmatprep.subr.mxu0 0.0
    %443 = vmatpush2.msra.mxu0 0.0
    %444 = vmatprep.subr.mxu0 0.0
    %445 = vmatpush2.msra.mxu0 0.0
    %446 = vmatprep.subr.mxu0 0.0
    %447 = vmatpush2.msra.mxu0 0.0
    %448 = vmatprep.subr.mxu0 0.0
    %449 = vmatpush2.msra.mxu0 0.0
    %450 = vmatprep.subr.mxu0 0.0
    %451 = vmatpush2.msra.mxu0 0.0
    %452 = vmatprep.mubr.f32.mxu0 0.0
    %453 = vmatmul.mubr.f32.gmra.mxu0 %v196
    %v454 = vpop.f32.mrf.mxu0
    %v455 = vadd.f32 %v188, %v454
    %v456 = vpop.f32.mrf.mxu0
    %v457 = vadd.f32 %v188, %v456
    %458 = vmatprep.mubr.f32.mxu0 0.0
    %459 = vmatmul.mubr.f32.gmra.mxu0 %v199
    %v460 = vpop.f32.mrf.mxu0
    %v461 = vadd.f32 %v193, %v460
    %v462 = vpop.f32.mrf.mxu0
    %v463 = vadd.f32 %v193, %v462
    %464 = vdwg.mxu0
    %s465 = scalar_lea.vmem [#allocation5], 32
    %466 = vst [vmem:[%s465] sm:$0xff] %v455
    %467 = vst [vmem:[%s465 + $0x8] sm:$0xff] %v457
    %468 = vst [vmem:[%s465 + $0x10] sm:$0xff] %v461
    %469 = vst [vmem:[%s465 + $0x18] sm:$0xff] %v463
    // Predicated region
    $region26: #{tpu_custom_call.1} parent=1 // pred_check
      _
    $region27: #{tpu_custom_call.1} parent=1 // pred_check_branch
      %471 = sbr.rel (0) target = $region29
    $region28: #{tpu_custom_call.1} parent=1 // pred_region
      %s473 = ssub.s32 1024, 1024
      %474 = vsyncadd [#allocation4], %s473
      %s475 = sshll.u32 [#allocation5], 4
      %s476 = int_to_ptr.vmem [resolvable:$true] %s475
      %481 = dma.vmem_to_hbm [thread:$0]  %s476, 1024, %s5, [#allocation4], 256, 256, 16
    $region29: #{tpu_custom_call.1} parent=1 // pred_fallthru
      _
    // Predicated region
    $region30: #{tpu_custom_call.1} parent=1 // pred_check
      _
    $region31: #{tpu_custom_call.1} parent=1 // pred_check_branch
      %483 = sbr.rel (0) target = $region33
    $region32: #{tpu_custom_call.1} parent=1 // pred_region
      %484 = dma.done [#allocation4], 1024
    $region33: #{tpu_custom_call.1} parent=1 // pred_fallthru
      _
    %485 = vsyncpa [#allocation3], 1
    %486 = vsyncpa [#allocation4], 1

</llo_original>
